<compile_context>
chip_gen: v5e
topology: v5e:2x2
jax: 0.10.0
libtpu: 0.0.40
codegen_flags: <defaults>
</compile_context>

<pallas_src>
import jax
import jax.numpy as jnp
from jax import lax
from jax.experimental import pallas as pl
from jax.experimental.pallas import tpu as pltpu


def _round_up(x: int, m: int) -> int:
    return (x + m - 1) // m * m


def _largest_tile(total: int, base: int, target: int) -> int:
    """Largest multiple of `base` that divides `total` and is <= max(base, target)."""
    target = max(base, min(target, total))
    t = (target // base) * base
    while t > base and total % t != 0:
        t -= base
    return t


def _vmem_limit_bytes() -> int:
    """Scoped VMEM limit: half of physical VMEM, capped at 64 MiB (32 MiB fallback)."""
    default = 32 * 1024 * 1024
    try:
        cap = int(pltpu.get_tpu_info().vmem_capacity_bytes)
    except Exception:
        return default
    return max(default, min(cap // 2, 64 * 1024 * 1024))


def _linear_head_kernel(x_ref, w_ref, b_ref, o_ref):
    # x_ref : (tm, E)  original input dtype (cast to compute dtype here)
    # w_ref : (tn, E)  compute dtype, nn.Linear layout (rows = classes)
    # b_ref : (1, tn)  f32
    # o_ref : (tm, tn) final output dtype
    w = w_ref[...]
    x = x_ref[...].astype(w.dtype)              # no-op when dtypes already match
    acc = lax.dot_general(                      # x @ W^T : contract emb_dim of both
        x, w,
        dimension_numbers=(((1,), (1,)), ((), ())),
        preferred_element_type=jnp.float32,
    )
    o_ref[...] = (acc + b_ref[...]).astype(o_ref.dtype)


def linear_head(
    x: jax.Array,
    weight: jax.Array,
    bias: jax.Array,
    *,
    compute_dtype=jnp.bfloat16,   # explicit precision knob; jnp.float32 = exact nn.Linear math
    out_dtype=None,               # default: x.dtype (written directly by the kernel)
    tm_target: int = 512,         # batch-tile target (multiple of 8)
    tn_target: int = 512,         # class-tile target (multiple of 128, lane-dense)
) -> jax.Array:
    """Pallas equivalent of nn.Linear(emb_dim, num_classes).forward(x)."""
    batch, emb_dim = x.shape
    num_classes, emb_dim_w = weight.shape
    assert emb_dim == emb_dim_w, "weight emb_dim mismatch"
    assert bias.shape == (num_classes,)

    out_dtype = jnp.dtype(x.dtype if out_dtype is None else out_dtype)
    compute_dtype = jnp.dtype(compute_dtype)
    x_itemsize = jnp.dtype(x.dtype).itemsize
    w_itemsize = compute_dtype.itemsize

    # ---- minimal padding: batch -> 8, classes -> 128 (lane-dense output) ----
    b_pad = _round_up(batch, 8)
    c_pad = _round_up(num_classes, 128)

    # ---- tile selection: divisors of the padded sizes, sized to VMEM budget ----
    vmem_limit = _vmem_limit_bytes()
    budget = vmem_limit - 4 * 1024 * 1024   # headroom for Mosaic internals

    def footprint(tm_, tn_):
        # double-buffered input/bias/output tiles
        return 2 * (tm_ * emb_dim * x_itemsize
                    + tn_ * emb_dim * w_itemsize
                    + tn_ * 4
                    + tm_ * tn_ * out_dtype.itemsize)

    tm = _largest_tile(b_pad, 8, tm_target)
    tn = _largest_tile(c_pad, 128, tn_target)

    # Prefer whole-W VMEM residency: W is then read from HBM exactly once.
    if footprint(tm, c_pad) <= budget:
        tn = c_pad
    # Shrink until the working set fits (tm first: keeps tn lane-dense / W resident).
    while footprint(tm, tn) > budget:
        if tm > 8:
            tm = _largest_tile(b_pad, 8, tm // 2)
        elif tn > 128:
            tn = _largest_tile(c_pad, 128, tn // 2)
        else:
            break

    # Expose >= 2 tiles along a parallel axis when possible (v7x dual TensorCore).
    if b_pad // tm == 1 and c_pad // tn == 1:
        if c_pad >= 256:
            tn = _largest_tile(c_pad, 128, c_pad // 2)
        elif b_pad >= 16:
            tm = _largest_tile(b_pad, 8, b_pad // 2)

    grid_b, grid_c = b_pad // tm, c_pad // tn

    # ---- host-side prep ----
    # x passes through untouched (in-kernel cast); pad only if batch misaligned.
    xp = x if b_pad == batch else jnp.pad(x, ((0, b_pad - batch), (0, 0)))
    # W / bias are static and tiny relative to activations: one cheap cast/pad pass
    # so the resident copy is already in the compute dtype (half the VMEM, no
    # per-grid-step recast of the whole weight).
    wp = weight.astype(compute_dtype)
    bp = bias.astype(jnp.float32)
    if c_pad != num_classes:
        wp = jnp.pad(wp, ((0, c_pad - num_classes), (0, 0)))
        bp = jnp.pad(bp, (0, c_pad - num_classes))
    bp = bp.reshape(1, c_pad)

    # ---- grid order: pay the smaller restream cost ----
    x_bytes = b_pad * emb_dim * x_itemsize
    w_bytes = c_pad * emb_dim * w_itemsize
    restream_batch_outer = 0 if grid_c == 1 else w_bytes * (grid_b - 1)
    restream_class_outer = 0 if grid_b == 1 else x_bytes * (grid_c - 1)
    batch_outer = restream_batch_outer <= restream_class_outer

    if batch_outer:
        grid = (grid_b, grid_c)
        x_map = lambda i, j: (i, 0)
        w_map = lambda i, j: (j, 0)
        b_map = lambda i, j: (0, j)
        o_map = lambda i, j: (i, j)
    else:
        grid = (grid_c, grid_b)
        x_map = lambda j, i: (i, 0)
        w_map = lambda j, i: (j, 0)
        b_map = lambda j, i: (0, j)
        o_map = lambda j, i: (i, j)

    w_reads = 1 if (grid_c == 1 or not batch_outer) else grid_b
    x_reads = 1 if (grid_b == 1 or batch_outer) else grid_c
    bytes_accessed = (x_bytes * x_reads + w_bytes * w_reads
                      + c_pad * 4 + b_pad * c_pad * out_dtype.itemsize)

    out = pl.pallas_call(
        _linear_head_kernel,
        out_shape=jax.ShapeDtypeStruct((b_pad, c_pad), out_dtype),
        grid_spec=pltpu.PrefetchScalarGridSpec(
            num_scalar_prefetch=0,
            grid=grid,
            in_specs=[
                pl.BlockSpec((tm, emb_dim), x_map),   # x tile: full K, original dtype
                pl.BlockSpec((tn, emb_dim), w_map),   # W tile: full K, (C,E) layout
                pl.BlockSpec((1, tn), b_map),         # bias tracks class tile
            ],
            out_specs=pl.BlockSpec((tm, tn), o_map),
        ),
        compiler_params=pltpu.CompilerParams(
            dimension_semantics=("parallel", "parallel"),
            vmem_limit_bytes=vmem_limit,
        ),
        cost_estimate=pl.CostEstimate(
            flops=2 * b_pad * emb_dim * c_pad,
            transcendentals=0,
            bytes_accessed=bytes_accessed,
        ),
    )(xp, wp, bp)

    # Slice away padding (identity when nothing was padded); dtype already final.
    return out[:batch, :num_classes]


if __name__ == "__main__":
    # Small shapes consistent with the module: x is (batch, emb_dim) -> (batch, num_classes).
    batch = 8
    emb_dim = 32          # stands in for CLIP latent_dim from the config file
    # TODO(synk): emb_dim comes from configs/CLIP_config.yaml in the original; passed explicitly here.
    classes = ["cat", "dog", "bird", "fish"]
    num_classes = len(classes)

    key = jax.random.PRNGKey(0)
    kx, kw, kb = jax.random.split(key, 3)

    x = jax.random.normal(kx, (batch, emb_dim), dtype=jnp.float32)
    # Deterministic nn.Linear-style init: U(-1/sqrt(in), 1/sqrt(in))
    bound = 1.0 / jnp.sqrt(jnp.float32(emb_dim))
    weight = jax.random.uniform(
        kw, (num_classes, emb_dim), minval=-bound, maxval=bound, dtype=jnp.float32
    )
    bias = jax.random.uniform(
        kb, (num_classes,), minval=-bound, maxval=bound, dtype=jnp.float32
    )

    # Default fast path: bf16 MXU compute, f32 accumulate, f32 output.
    y = jax.block_until_ready(linear_head(x, weight, bias))
    assert y.shape == (batch, num_classes)
    assert y.dtype == x.dtype

    x_b = x.astype(jnp.bfloat16).astype(jnp.float32)
    w_b = weight.astype(jnp.bfloat16).astype(jnp.float32)
    y_ref_bf16 = x_b @ w_b.T + bias
    assert jnp.allclose(y, y_ref_bf16, atol=1e-2, rtol=1e-2)

    # Explicit f32 compute path (documented precision knob matching nn.Linear math).
    y32 = jax.block_until_ready(linear_head(x, weight, bias, compute_dtype=jnp.float32))
    y_ref_f32 = x @ weight.T + bias
    assert jnp.allclose(y32, y_ref_f32, atol=2e-2, rtol=2e-2)
    assert jnp.allclose(y, y_ref_f32, atol=5e-2, rtol=5e-2)

    print("KERNEL_OK")
</pallas_src>

<mosaic_0001>
module attributes {stable_mosaic.version = 11 : i64} {
  func.func @_linear_head_kernel(%arg0: i32, %arg1: i32, %arg2: memref<8x32xf32, #tpu.memory_space<vmem>>, %arg3: memref<128x32xbf16, #tpu.memory_space<vmem>>, %arg4: memref<1x128xf32, #tpu.memory_space<vmem>>, %arg5: memref<8x128xf32, #tpu.memory_space<vmem>>) attributes {dimension_semantics = [#tpu.dimension_semantics<parallel>, #tpu.dimension_semantics<parallel>], iteration_bounds = array<i64: 1, 1>, scalar_prefetch = 0 : i64, scratch_operands = 0 : i64, tpu.core_type = #tpu.core_type<tc>, window_params = [{transform_indices = @transform_0, window_bounds = array<i64: 8, 32>}, {transform_indices = @transform_1, window_bounds = array<i64: 128, 32>}, {transform_indices = @transform_2, window_bounds = array<i64: 1, 128>}, {transform_indices = @transform_3, window_bounds = array<i64: 8, 128>}]} {
    %c0 = arith.constant 0 : index
    %c0_0 = arith.constant 0 : index
    %0 = vector.load %arg3[%c0, %c0_0] : memref<128x32xbf16, #tpu.memory_space<vmem>>, vector<128x32xbf16>
    %c0_1 = arith.constant 0 : index
    %c0_2 = arith.constant 0 : index
    %1 = vector.load %arg2[%c0_1, %c0_2] : memref<8x32xf32, #tpu.memory_space<vmem>>, vector<8x32xf32>
    %2 = arith.truncf %1 : vector<8x32xf32> to vector<8x32xbf16>
    %cst = arith.constant dense<0.000000e+00> : vector<8x128xf32>
    %3 = tpu.matmul %2, %0, %cst {dimension_numbers = #tpu.dot_dimension_numbers<[1], [1], [0], [0], [0, 0, 1, 0], [], []>} : vector<8x32xbf16>, vector<128x32xbf16>, vector<8x128xf32> -> vector<8x128xf32>
    %c0_3 = arith.constant 0 : index
    %c0_4 = arith.constant 0 : index
    %4 = vector.load %arg4[%c0_3, %c0_4] : memref<1x128xf32, #tpu.memory_space<vmem>>, vector<1x128xf32>
    %5 = vector.broadcast %4 : vector<1x128xf32> to vector<8x128xf32>
    %6 = arith.addf %3, %5 : vector<8x128xf32>
    %c0_5 = arith.constant 0 : index
    %c0_6 = arith.constant 0 : index
    %7 = vector.load %arg5[%c0_5, %c0_6] : memref<8x128xf32, #tpu.memory_space<vmem>>, vector<8x128xf32>
    tpu.vector_store %arg5[%c0_5, %c0_6], %6 {strides = array<i32>} : memref<8x128xf32, #tpu.memory_space<vmem>>, vector<8x128xf32>,
    return
  }
  func.func @transform_0(%arg0: i32, %arg1: i32) -> (i32, i32) {
    %c0_i32 = arith.constant 0 : i32
    %c0_i32_0 = arith.constant 0 : i32
    return %arg0, %c0_i32 : i32, i32
  }
  func.func @transform_1(%arg0: i32, %arg1: i32) -> (i32, i32) {
    %c0_i32 = arith.constant 0 : i32
    %c0_i32_0 = arith.constant 0 : i32
    return %arg1, %c0_i32 : i32, i32
  }
  func.func @transform_2(%arg0: i32, %arg1: i32) -> (i32, i32) {
    %c0_i32 = arith.constant 0 : i32
    %c0_i32_0 = arith.constant 0 : i32
    return %c0_i32, %arg1 : i32, i32
  }
  func.func @transform_3(%arg0: i32, %arg1: i32) -> (i32, i32) {
    %c0_i32 = arith.constant 0 : i32
    return %arg0, %arg1 : i32, i32
  }
}

</mosaic_0001>

<llo_original>
// kernel: tpu_custom_call.1
$region0: #{tpu_custom_call.1}
  #allocation0 [shape = 'u32[]', space=smem, size = 0x4, offset = 0x4, fixed_abs, tag = 'smem constant byte address 0x4 - core index']
  #allocation1 [shape = 'u32[72,128]{1,0:T(1,128)}', space=vmem, size = 0x9000, scoped, tag = 'internal scratch']
  %s0 = inlined_call_operand.vmem [shape: f32[8,32], index: 0, kind: input, shape index: {}]
  %s1 = inlined_call_operand.vmem [shape: bf16[128,32], index: 1, kind: input, shape index: {}]
  %s2 = inlined_call_operand.vmem [shape: f32[1,128], index: 2, kind: input, shape index: {}]
  %s3 = inlined_call_operand.hbm [shape: f32[8,128], index: 3, kind: output, shape index: {}]
  %s4 = sld [smem:[#allocation0]]
  $region22: #{tpu_custom_call.1} parent=0
    _
  %s6 = ssub.s32 1, %s4
  %s7 = scalar_select 0, %s6, %s4
  $region1: #{tpu_custom_call.1} parent=0
    #allocation2 [shape = 'u8[4096]{0}', space=vmem, size = 0x1000, scoped, tag = 'output window, operand 0, single buffered']
    #allocation3 [shape = 's32[1]{0}', space=sflag, size = 0x4, scoped, tag = 'scoped memory for tpu_custom_call.1']
    %8 = vsyncpa [#allocation3], 0
    // Predicated region
    $region2: #{tpu_custom_call.1} parent=1 // pred_check
      _
    $region3: #{tpu_custom_call.1} parent=1 // pred_check_branch
      %10 = sbr.rel (0) target = $region5
    $region4: #{tpu_custom_call.1} parent=1 // pred_region
      _
    $region5: #{tpu_custom_call.1} parent=1 // pred_fallthru
      _
    // Predicated region
    $region6: #{tpu_custom_call.1} parent=1 // pred_check
      _
    $region7: #{tpu_custom_call.1} parent=1 // pred_check_branch
      %12 = sbr.rel (0) target = $region9
    $region8: #{tpu_custom_call.1} parent=1 // pred_region
      _
    $region9: #{tpu_custom_call.1} parent=1 // pred_fallthru
      _
    // Predicated region
    $region10: #{tpu_custom_call.1} parent=1 // pred_check
      _
    $region11: #{tpu_custom_call.1} parent=1 // pred_check_branch
      %14 = sbr.rel (0) target = $region13
    $region12: #{tpu_custom_call.1} parent=1 // pred_region
      _
    $region13: #{tpu_custom_call.1} parent=1 // pred_fallthru
      _
    %v15 = vld [vmem:[%s1] sm:$0xf]
    %v16 = vld [vmem:[%s1 + $0x4] sm:$0xf]
    %v17 = vld [vmem:[%s1 + $0x8] sm:$0xf]
    %v18 = vld [vmem:[%s1 + $0xc] sm:$0xf]
    %v19 = vld [vmem:[%s1 + $0x10] sm:$0xf]
    %v20 = vld [vmem:[%s1 + $0x14] sm:$0xf]
    %v21 = vld [vmem:[%s1 + $0x18] sm:$0xf]
    %v22 = vld [vmem:[%s1 + $0x1c] sm:$0xf]
    %v23 = vld [vmem:[%s1 + $0x20] sm:$0xf]
    %v24 = vld [vmem:[%s1 + $0x24] sm:$0xf]
    %v25 = vld [vmem:[%s1 + $0x28] sm:$0xf]
    %v26 = vld [vmem:[%s1 + $0x2c] sm:$0xf]
    %v27 = vld [vmem:[%s1 + $0x30] sm:$0xf]
    %v28 = vld [vmem:[%s1 + $0x34] sm:$0xf]
    %v29 = vld [vmem:[%s1 + $0x38] sm:$0xf]
    %v30 = vld [vmem:[%s1 + $0x3c] sm:$0xf]
    %v31 = vld [vmem:[%s0] sm:$0xff]
    %v32 = vpack.c.bf16 %v31, %v31
    %v33 = vld [vmem:[%s2] sm:$0x1]
    %v35 = vperm.slane %v33, 0
    %v53 = vunpack.c.l.b16 %v15
    %v54 = vunpack.c.l.b16 %v16
    %v55 = vunpack.c.l.b16 %v17
    %v56 = vunpack.c.l.b16 %v18
    %v57 = vunpack.c.l.b16 %v19
    %v58 = vunpack.c.l.b16 %v20
    %v59 = vunpack.c.l.b16 %v21
    %v60 = vunpack.c.l.b16 %v22
    %v61 = vunpack.c.l.b16 %v23
    %v62 = vunpack.c.l.b16 %v24
    %v63 = vunpack.c.l.b16 %v25
    %v64 = vunpack.c.l.b16 %v26
    %v65 = vunpack.c.l.b16 %v27
    %v66 = vunpack.c.l.b16 %v28
    %v67 = vunpack.c.l.b16 %v29
    %v68 = vunpack.c.l.b16 %v30
    %v69 = vpack.c.b16 %v54, %v53
    %v70 = vpack.c.b16 %v56, %v55
    %v71 = vpack.c.b16 %v58, %v57
    %v72 = vpack.c.b16 %v60, %v59
    %v73 = vpack.c.b16 %v62, %v61
    %v74 = vpack.c.b16 %v64, %v63
    %v75 = vpack.c.b16 %v66, %v65
    %v76 = vpack.c.b16 %v68, %v67
    %vm77 = vcmask 261120
    %v79 = vsel %vm77, %v32, 0
    %v82 = vsel %vm77, %v69, 0
    %v85 = vsel %vm77, %v70, 0
    %v88 = vsel %vm77, %v71, 0
    %v91 = vsel %vm77, %v72, 0
    %v94 = vsel %vm77, %v73, 0
    %v97 = vsel %vm77, %v74, 0
    %v100 = vsel %vm77, %v75, 0
    %v103 = vsel %vm77, %v76, 0
    %105 = vmatpush.bf16.xpose.msra.mxu0 %v103
    %106 = vmatpush.bf16.xpose.msra.mxu0 %v100
    %107 = vmatpush.bf16.xpose.msra.mxu0 %v97
    %108 = vmatpush.bf16.xpose.msra.mxu0 %v94
    %109 = vmatpush.bf16.xpose.msra.mxu0 %v91
    %110 = vmatpush.bf16.xpose.msra.mxu0 %v88
    %111 = vmatpush.bf16.xpose.msra.mxu0 %v85
    %112 = vmatpush.bf16.xpose.msra.mxu0 %v82
    %113 = vmatmul.bf16.gmra.mxu0 %v79
    %v114 = vpop.f32.mrf.mxu0
    %v115 = vadd.f32 %v35, %v114
    %v116 = vpop.f32.mrf.mxu0
    %117 = vdwg.mxu0
    %118 = vst [vmem:[#allocation2] sm:$0xff] %v115
    // Predicated region
    $region14: #{tpu_custom_call.1} parent=1 // pred_check
      _
    $region15: #{tpu_custom_call.1} parent=1 // pred_check_branch
      %120 = sbr.rel (0) target = $region17
    $region16: #{tpu_custom_call.1} parent=1 // pred_region
      %122 = vsyncadd [#allocation3], 0
      %s124 = sshll.u32 [#allocation2], 4
      %s125 = int_to_ptr.vmem [resolvable:$true] %s124
      %s126 = sshll.u32 %s3, 4
      %s127 = int_to_ptr.hbm [resolvable:$true] %s126
      %129 = dma.vmem_to_hbm [thread:$0]  %s125, 128, %s127, [#allocation3]
    $region17: #{tpu_custom_call.1} parent=1 // pred_fallthru
      _
    // Predicated region
    $region18: #{tpu_custom_call.1} parent=1 // pred_check
      _
    $region19: #{tpu_custom_call.1} parent=1 // pred_check_branch
      %131 = sbr.rel (0) target = $region21
    $region20: #{tpu_custom_call.1} parent=1 // pred_region
      %133 = dma.done [#allocation3], 128
    $region21: #{tpu_custom_call.1} parent=1 // pred_fallthru
      _
    %134 = vsyncpa [#allocation3], 1

</llo_original>
